<compile_context>
chip_gen: v7x
topology: tpu7x:2x2x1
jax: 0.10.0
libtpu: 0.0.40
codegen_flags: <defaults>
</compile_context>

<pallas_src>
import functools

import jax
import jax.numpy as jnp
from jax import lax
from jax.experimental import pallas as pl
from jax.experimental.pallas import tpu as pltpu


_VMEM_LIMIT_BYTES = 48 * 1024 * 1024   # portable across v5e/v6e (128 MiB) & v7x (64 MiB)
_VMEM_WORK_BUDGET = 36 * 1024 * 1024   # budget for tile-sized live f32 arrays


def _calc_impute_kernel(dist_ref, fd_ref, dm_ref, out_ref, *, n_neighbors):
    d = dist_ref[...]                       # (TM, D) f32 distances (tile of receivers)
    TM, D = d.shape

    # nan_to_num(dist, nan=1e10)
    work = jnp.where(jnp.isnan(d), jnp.float32(1e10), d)

    lane = lax.broadcasted_iota(jnp.int32, (TM, D), 1)
    sel = jnp.zeros((TM, D), jnp.float32)   # selection mask per donor lane (0/1)
    sentinel = jnp.int32(D)

    def pick_one(carry):
        work, sel = carry
        # row minimum and its FIRST occurrence (stable tie-break, like argsort)
        m = jnp.min(work, axis=1, keepdims=True)
        idx = jnp.min(jnp.where(work == m, lane, sentinel), axis=1, keepdims=True)
        onehot = lane == idx
        sel = sel + onehot.astype(jnp.float32)
        # knock selected lane out of further consideration
        work = jnp.where(onehot, jnp.float32(jnp.inf), work)
        return work, sel

    if n_neighbors <= 8:
        carry = (work, sel)
        for _ in range(n_neighbors):            # short, fully unrolled
            carry = pick_one(carry)
        _, sel = carry
    else:
        _, sel = lax.fori_loop(0, n_neighbors, lambda _, c: pick_one(c), (work, sel))

    # Single end-of-tile "gather" of donor values / donor masks (hoisted out of
    # the per-neighbor loop).  fd = fit * (1 - mask), dm = (1 - mask), both (1, D)
    # resident in VMEM and broadcast implicitly — no materialized (TM, D) copies.
    wd = jnp.sum(sel * fd_ref[...], axis=1, keepdims=True)   # sum(donors * new_weights)
    w = jnp.sum(sel * dm_ref[...], axis=1, keepdims=True)    # sum(new_weights)
    div = jnp.where(w == 0.0, jnp.float32(1.0), w)
    out_ref[...] = (wd / div).astype(out_ref.dtype)


def _round_up(x, m):
    return ((x + m - 1) // m) * m


def _choose_tm(n_pad8, d):
    # ~8 tile-sized f32 arrays live at peak: double-buffered dist input, `work`,
    # `sel`, the lane iota and a couple of per-iteration temporaries.
    per_row_bytes = 8 * d * 4
    tm = _VMEM_WORK_BUDGET // per_row_bytes
    tm = (tm // 8) * 8
    tm = max(8, min(1024, tm))
    return min(tm, n_pad8)


def calc_impute(dist_pot_donors, n_neighbors, fit_X_col, mask_fit_X_col, *, tm=None):
    """Pallas implementation of KNNImputer._calc_impute (weights='uniform')."""
    orig_dtype = dist_pot_donors.dtype
    dist = dist_pot_donors.astype(jnp.float32)
    N, D = dist.shape

    # Mirror ColProcessor's clamp: 1 <= n_neighbors <= number of potential donors.
    k = max(1, min(int(n_neighbors), D))

    n_pad8 = _round_up(max(N, 8), 8)
    if tm is None:
        tm = _choose_tm(n_pad8, D)
    tm = max(8, _round_up(min(int(tm), n_pad8), 8))

    num_tiles = pl.cdiv(max(N, 1), tm)
    n_pad = num_tiles * tm
    if n_pad != N:
        # Padded rows compute garbage that is sliced off below (rows are independent).
        dist = jnp.pad(dist, ((0, n_pad - N), (0, 0)))

    dm = (1.0 - mask_fit_X_col.astype(jnp.float32)).reshape(1, D)   # donor not-missing
    fd = fit_X_col.astype(jnp.float32).reshape(1, D) * dm           # donor value * mask

    kernel = functools.partial(_calc_impute_kernel, n_neighbors=k)

    out = pl.pallas_call(
        kernel,
        out_shape=jax.ShapeDtypeStruct((n_pad, 1), jnp.float32),
        grid_spec=pltpu.PrefetchScalarGridSpec(
            num_scalar_prefetch=0,
            grid=(num_tiles,),
            in_specs=[
                pl.BlockSpec((tm, D), lambda i: (i, 0)),   # dist tile (receiver rows)
                pl.BlockSpec((1, D), lambda i: (0, 0)),    # fit*(1-mask), resident
                pl.BlockSpec((1, D), lambda i: (0, 0)),    # (1-mask), resident
            ],
            out_specs=pl.BlockSpec((tm, 1), lambda i: (i, 0)),
        ),
        compiler_params=pltpu.CompilerParams(
            dimension_semantics=("parallel",),
            vmem_limit_bytes=_VMEM_LIMIT_BYTES,
        ),
    )(dist, fd, dm)

    return out[:N, 0].astype(orig_dtype)   # squeeze(dim=1), back to input dtype


def _reference(dist, k, fit, mask):
    """Pure-JAX reference mirroring the PyTorch module (uniform weights)."""
    xn = jnp.where(jnp.isnan(dist), 1e10, dist)
    order = jnp.argsort(xn, axis=1)[:, :k]
    donors = fit[order]
    dmask = 1.0 - mask[order]
    nw = dmask * jnp.ones_like(dmask)
    ws = nw.sum(axis=1, keepdims=True)
    div = jnp.where(ws == 0.0, 1.0, ws)
    return ((donors * nw).sum(axis=1, keepdims=True) / div)[:, 0]


if __name__ == "__main__":
    key = jax.random.PRNGKey(0)

    def make_case(k, n_receivers, n_donors, nan_rate=0.15, miss_rate=0.2):
        k_dist, k_nan, k_fit, k_msk = jax.random.split(k, 4)
        dist = jax.random.uniform(k_dist, (n_receivers, n_donors), jnp.float32)
        nan_mask = jax.random.bernoulli(k_nan, nan_rate, (n_receivers, n_donors))
        dist = jnp.where(nan_mask, jnp.nan, dist)
        fit = jax.random.normal(k_fit, (n_donors,), jnp.float32)
        msk = jax.random.bernoulli(k_msk, miss_rate, (n_donors,)).astype(jnp.float32)
        return dist, fit, msk

    k1, k2 = jax.random.split(key)

    # Case 1: receiver count not a multiple of 8 -> exercises tail padding + auto tm.
    dist, fit, msk = make_case(k1, 19, 64)
    res = jax.block_until_ready(calc_impute(dist, 5, fit, msk))
    ref = _reference(dist, 5, fit, msk)
    assert res.shape == (19,) and res.dtype == dist.dtype
    assert jnp.allclose(res, ref, atol=1e-5, rtol=1e-5), (res, ref)

    # Case 2: multiple row tiles (explicit tm) -> exercises the grid loop and the
    # resident (1, D) donor vectors across grid steps.
    dist, fit, msk = make_case(k2, 300, 128)
    res = jax.block_until_ready(calc_impute(dist, 7, fit, msk, tm=128))
    ref = _reference(dist, 7, fit, msk)
    assert res.shape == (300,) and res.dtype == dist.dtype
    assert jnp.allclose(res, ref, atol=1e-5, rtol=1e-5), (res, ref)

    print("KERNEL_OK")
</pallas_src>

<mosaic_0001>
module attributes {stable_mosaic.version = 11 : i64} {
  func.func @_calc_impute_kernel(%arg0: i32, %arg1: memref<24x64xf32, #tpu.memory_space<vmem>>, %arg2: memref<1x64xf32, #tpu.memory_space<vmem>>, %arg3: memref<1x64xf32, #tpu.memory_space<vmem>>, %arg4: memref<24x1xf32, #tpu.memory_space<vmem>>) attributes {dimension_semantics = [#tpu.dimension_semantics<parallel>], iteration_bounds = array<i64: 1>, scalar_prefetch = 0 : i64, scratch_operands = 0 : i64, tpu.core_type = #tpu.core_type<tc>, window_params = [{transform_indices = @transform_0, window_bounds = array<i64: 24, 64>}, {pipeline_mode = #tpu.pipeline_mode<synchronous>, transform_indices = @transform_1, window_bounds = array<i64: 1, 64>}, {pipeline_mode = #tpu.pipeline_mode<synchronous>, transform_indices = @transform_2, window_bounds = array<i64: 1, 64>}, {transform_indices = @transform_3, window_bounds = array<i64: 24, 1>}]} {
    %c0 = arith.constant 0 : index
    %c0_0 = arith.constant 0 : index
    %0 = vector.load %arg1[%c0, %c0_0] : memref<24x64xf32, #tpu.memory_space<vmem>>, vector<24x64xf32>
    %1 = arith.cmpf one, %0, %0 : vector<24x64xf32>
    %cst = arith.constant 1.000000e+10 : f32
    %2 = vector.broadcast %cst : f32 to vector<24x64xf32>
    %3 = arith.select %1, %2, %0 : vector<24x64xi1>, vector<24x64xf32>
    %4 = tpu.iota {dimensions = array<i32: 1>} : vector<24x64xi32>
    %cst_1 = arith.constant 0.000000e+00 : f32
    %5 = vector.broadcast %cst_1 : f32 to vector<24x64xf32>
    %cst_2 = arith.constant dense<0x7F800000> : vector<24xf32>
    %6 = vector.multi_reduction <minimumf>, %3, %cst_2 [1] : vector<24x64xf32> to vector<24xf32>
    %7 = vector.shape_cast %6 : vector<24xf32> to vector<24x1xf32>
    %8 = vector.broadcast %7 : vector<24x1xf32> to vector<24x64xf32>
    %9 = arith.cmpf oeq, %3, %8 : vector<24x64xf32>
    %c64_i32 = arith.constant 64 : i32
    %10 = vector.broadcast %c64_i32 : i32 to vector<24x64xi32>
    %11 = arith.select %9, %4, %10 : vector<24x64xi1>, vector<24x64xi32>
    %cst_3 = arith.constant dense<2147483647> : vector<24xi32>
    %12 = vector.multi_reduction <minsi>, %11, %cst_3 [1] : vector<24x64xi32> to vector<24xi32>
    %13 = vector.shape_cast %12 : vector<24xi32> to vector<24x1xi32>
    %14 = vector.broadcast %13 : vector<24x1xi32> to vector<24x64xi32>
    %15 = arith.cmpi eq, %4, %14 : vector<24x64xi32>
    %16 = arith.extui %15 : vector<24x64xi1> to vector<24x64xi32>
    %17 = arith.sitofp %16 : vector<24x64xi32> to vector<24x64xf32>
    %18 = arith.addf %5, %17 : vector<24x64xf32>
    %cst_4 = arith.constant 0x7F800000 : f32
    %19 = vector.broadcast %cst_4 : f32 to vector<24x64xf32>
    %20 = arith.select %15, %19, %3 : vector<24x64xi1>, vector<24x64xf32>
    %cst_5 = arith.constant dense<0x7F800000> : vector<24xf32>
    %21 = vector.multi_reduction <minimumf>, %20, %cst_5 [1] : vector<24x64xf32> to vector<24xf32>
    %22 = vector.shape_cast %21 : vector<24xf32> to vector<24x1xf32>
    %23 = vector.broadcast %22 : vector<24x1xf32> to vector<24x64xf32>
    %24 = arith.cmpf oeq, %20, %23 : vector<24x64xf32>
    %c64_i32_6 = arith.constant 64 : i32
    %25 = vector.broadcast %c64_i32_6 : i32 to vector<24x64xi32>
    %26 = arith.select %24, %4, %25 : vector<24x64xi1>, vector<24x64xi32>
    %cst_7 = arith.constant dense<2147483647> : vector<24xi32>
    %27 = vector.multi_reduction <minsi>, %26, %cst_7 [1] : vector<24x64xi32> to vector<24xi32>
    %28 = vector.shape_cast %27 : vector<24xi32> to vector<24x1xi32>
    %29 = vector.broadcast %28 : vector<24x1xi32> to vector<24x64xi32>
    %30 = arith.cmpi eq, %4, %29 : vector<24x64xi32>
    %31 = arith.extui %30 : vector<24x64xi1> to vector<24x64xi32>
    %32 = arith.sitofp %31 : vector<24x64xi32> to vector<24x64xf32>
    %33 = arith.addf %18, %32 : vector<24x64xf32>
    %cst_8 = arith.constant 0x7F800000 : f32
    %34 = vector.broadcast %cst_8 : f32 to vector<24x64xf32>
    %35 = arith.select %30, %34, %20 : vector<24x64xi1>, vector<24x64xf32>
    %cst_9 = arith.constant dense<0x7F800000> : vector<24xf32>
    %36 = vector.multi_reduction <minimumf>, %35, %cst_9 [1] : vector<24x64xf32> to vector<24xf32>
    %37 = vector.shape_cast %36 : vector<24xf32> to vector<24x1xf32>
    %38 = vector.broadcast %37 : vector<24x1xf32> to vector<24x64xf32>
    %39 = arith.cmpf oeq, %35, %38 : vector<24x64xf32>
    %c64_i32_10 = arith.constant 64 : i32
    %40 = vector.broadcast %c64_i32_10 : i32 to vector<24x64xi32>
    %41 = arith.select %39, %4, %40 : vector<24x64xi1>, vector<24x64xi32>
    %cst_11 = arith.constant dense<2147483647> : vector<24xi32>
    %42 = vector.multi_reduction <minsi>, %41, %cst_11 [1] : vector<24x64xi32> to vector<24xi32>
    %43 = vector.shape_cast %42 : vector<24xi32> to vector<24x1xi32>
    %44 = vector.broadcast %43 : vector<24x1xi32> to vector<24x64xi32>
    %45 = arith.cmpi eq, %4, %44 : vector<24x64xi32>
    %46 = arith.extui %45 : vector<24x64xi1> to vector<24x64xi32>
    %47 = arith.sitofp %46 : vector<24x64xi32> to vector<24x64xf32>
    %48 = arith.addf %33, %47 : vector<24x64xf32>
    %cst_12 = arith.constant 0x7F800000 : f32
    %49 = vector.broadcast %cst_12 : f32 to vector<24x64xf32>
    %50 = arith.select %45, %49, %35 : vector<24x64xi1>, vector<24x64xf32>
    %cst_13 = arith.constant dense<0x7F800000> : vector<24xf32>
    %51 = vector.multi_reduction <minimumf>, %50, %cst_13 [1] : vector<24x64xf32> to vector<24xf32>
    %52 = vector.shape_cast %51 : vector<24xf32> to vector<24x1xf32>
    %53 = vector.broadcast %52 : vector<24x1xf32> to vector<24x64xf32>
    %54 = arith.cmpf oeq, %50, %53 : vector<24x64xf32>
    %c64_i32_14 = arith.constant 64 : i32
    %55 = vector.broadcast %c64_i32_14 : i32 to vector<24x64xi32>
    %56 = arith.select %54, %4, %55 : vector<24x64xi1>, vector<24x64xi32>
    %cst_15 = arith.constant dense<2147483647> : vector<24xi32>
    %57 = vector.multi_reduction <minsi>, %56, %cst_15 [1] : vector<24x64xi32> to vector<24xi32>
    %58 = vector.shape_cast %57 : vector<24xi32> to vector<24x1xi32>
    %59 = vector.broadcast %58 : vector<24x1xi32> to vector<24x64xi32>
    %60 = arith.cmpi eq, %4, %59 : vector<24x64xi32>
    %61 = arith.extui %60 : vector<24x64xi1> to vector<24x64xi32>
    %62 = arith.sitofp %61 : vector<24x64xi32> to vector<24x64xf32>
    %63 = arith.addf %48, %62 : vector<24x64xf32>
    %cst_16 = arith.constant 0x7F800000 : f32
    %64 = vector.broadcast %cst_16 : f32 to vector<24x64xf32>
    %65 = arith.select %60, %64, %50 : vector<24x64xi1>, vector<24x64xf32>
    %cst_17 = arith.constant dense<0x7F800000> : vector<24xf32>
    %66 = vector.multi_reduction <minimumf>, %65, %cst_17 [1] : vector<24x64xf32> to vector<24xf32>
    %67 = vector.shape_cast %66 : vector<24xf32> to vector<24x1xf32>
    %68 = vector.broadcast %67 : vector<24x1xf32> to vector<24x64xf32>
    %69 = arith.cmpf oeq, %65, %68 : vector<24x64xf32>
    %c64_i32_18 = arith.constant 64 : i32
    %70 = vector.broadcast %c64_i32_18 : i32 to vector<24x64xi32>
    %71 = arith.select %69, %4, %70 : vector<24x64xi1>, vector<24x64xi32>
    %cst_19 = arith.constant dense<2147483647> : vector<24xi32>
    %72 = vector.multi_reduction <minsi>, %71, %cst_19 [1] : vector<24x64xi32> to vector<24xi32>
    %73 = vector.shape_cast %72 : vector<24xi32> to vector<24x1xi32>
    %74 = vector.broadcast %73 : vector<24x1xi32> to vector<24x64xi32>
    %75 = arith.cmpi eq, %4, %74 : vector<24x64xi32>
    %76 = arith.extui %75 : vector<24x64xi1> to vector<24x64xi32>
    %77 = arith.sitofp %76 : vector<24x64xi32> to vector<24x64xf32>
    %78 = arith.addf %63, %77 : vector<24x64xf32>
    %c0_20 = arith.constant 0 : index
    %c0_21 = arith.constant 0 : index
    %79 = vector.load %arg2[%c0_20, %c0_21] : memref<1x64xf32, #tpu.memory_space<vmem>>, vector<1x64xf32>
    %80 = vector.broadcast %79 : vector<1x64xf32> to vector<24x64xf32>
    %81 = arith.mulf %78, %80 : vector<24x64xf32>
    %cst_22 = arith.constant dense<0.000000e+00> : vector<24xf32>
    %82 = vector.multi_reduction <add>, %81, %cst_22 [1] : vector<24x64xf32> to vector<24xf32>
    %83 = vector.shape_cast %82 : vector<24xf32> to vector<24x1xf32>
    %c0_23 = arith.constant 0 : index
    %c0_24 = arith.constant 0 : index
    %84 = vector.load %arg3[%c0_23, %c0_24] : memref<1x64xf32, #tpu.memory_space<vmem>>, vector<1x64xf32>
    %85 = vector.broadcast %84 : vector<1x64xf32> to vector<24x64xf32>
    %86 = arith.mulf %78, %85 : vector<24x64xf32>
    %cst_25 = arith.constant dense<0.000000e+00> : vector<24xf32>
    %87 = vector.multi_reduction <add>, %86, %cst_25 [1] : vector<24x64xf32> to vector<24xf32>
    %88 = vector.shape_cast %87 : vector<24xf32> to vector<24x1xf32>
    %cst_26 = arith.constant 0.000000e+00 : f32
    %89 = vector.broadcast %cst_26 : f32 to vector<24x1xf32>
    %90 = arith.cmpf oeq, %88, %89 : vector<24x1xf32>
    %cst_27 = arith.constant 1.000000e+00 : f32
    %91 = vector.broadcast %cst_27 : f32 to vector<24x1xf32>
    %92 = arith.select %90, %91, %88 : vector<24x1xi1>, vector<24x1xf32>
    %93 = arith.divf %83, %92 : vector<24x1xf32>
    %c0_28 = arith.constant 0 : index
    %c0_29 = arith.constant 0 : index
    %94 = vector.load %arg4[%c0_28, %c0_29] : memref<24x1xf32, #tpu.memory_space<vmem>>, vector<24x1xf32>
    tpu.vector_store %arg4[%c0_28, %c0_29], %93 {strides = array<i32>} : memref<24x1xf32, #tpu.memory_space<vmem>>, vector<24x1xf32>,
    return
  }
  func.func @transform_0(%arg0: i32) -> (i32, i32) {
    %c0_i32 = arith.constant 0 : i32
    %c0_i32_0 = arith.constant 0 : i32
    return %arg0, %c0_i32 : i32, i32
  }
  func.func @transform_1(%arg0: i32) -> (i32, i32) {
    %c0_i32 = arith.constant 0 : i32
    %c0_i32_0 = arith.constant 0 : i32
    %c0_i32_1 = arith.constant 0 : i32
    return %c0_i32, %c0_i32_0 : i32, i32
  }
  func.func @transform_2(%arg0: i32) -> (i32, i32) {
    %c0_i32 = arith.constant 0 : i32
    %c0_i32_0 = arith.constant 0 : i32
    %c0_i32_1 = arith.constant 0 : i32
    return %c0_i32, %c0_i32_0 : i32, i32
  }
  func.func @transform_3(%arg0: i32) -> (i32, i32) {
    %c0_i32 = arith.constant 0 : i32
    %c0_i32_0 = arith.constant 0 : i32
    return %arg0, %c0_i32 : i32, i32
  }
}

</mosaic_0001>

<llo_original>
// kernel: tpu_custom_call.1
$region0: #{tpu_custom_call.1}
  #allocation0 [shape = 'u32[]', space=smem, size = 0x4, offset = 0x4, fixed_abs, tag = 'smem constant byte address 0x4 - core index']
  #allocation1 [shape = 'u32[144,128]{1,0:T(1,128)}', space=vmem, size = 0x12000, scoped, tag = 'internal scratch']
  %s0 = inlined_call_operand.hbm [shape: f32[24,64], index: 0, kind: input, shape index: {}]
  %s1 = inlined_call_operand.vmem [shape: f32[1,64], index: 1, kind: input, shape index: {}]
  %s2 = inlined_call_operand.vmem [shape: f32[1,64], index: 2, kind: input, shape index: {}]
  %s3 = inlined_call_operand.vmem [shape: f32[24,1], index: 3, kind: output, shape index: {}]
  %s4 = sld [smem:[#allocation0]]
  $region26: #{tpu_custom_call.1} parent=0
    _
  %s6 = ssub.s32 1, %s4
  %s7 = scalar_select 0, %s6, %s4
  $region1: #{tpu_custom_call.1} parent=0
    #allocation2 [shape = 'u8[12288]{0}', space=vmem, size = 0x3000, scoped, tag = 'input window, operand 0, single buffered']
    #allocation3 [shape = 's32[1]{0}', space=sflag, size = 0x4, scoped, tag = 'scoped memory for tpu_custom_call.1']
    %8 = vsyncpa [#allocation3], 0
    // Predicated region
    $region2: #{tpu_custom_call.1} parent=1 // pred_check
      _
    $region3: #{tpu_custom_call.1} parent=1 // pred_check_branch
      %10 = sbr.rel (0) target = $region5
    $region4: #{tpu_custom_call.1} parent=1 // pred_region
      %s12 = ssub.s32 384, 384
      %13 = vsyncadd [#allocation3], %s12
      %s14 = sshll.u32 [#allocation2], 4
      %s15 = int_to_ptr.vmem [resolvable:$true] %s14
      %20 = dma.hbm_to_vmem [thread:$0]  %s0, 384, %s15, [#allocation3], 128, 128, 8
    $region5: #{tpu_custom_call.1} parent=1 // pred_fallthru
      _
    // Predicated region
    $region6: #{tpu_custom_call.1} parent=1 // pred_check
      _
    $region7: #{tpu_custom_call.1} parent=1 // pred_check_branch
      %22 = sbr.rel (0) target = $region9
    $region8: #{tpu_custom_call.1} parent=1 // pred_region
      _
    $region9: #{tpu_custom_call.1} parent=1 // pred_fallthru
      _
    // Predicated region
    $region10: #{tpu_custom_call.1} parent=1 // pred_check
      _
    $region11: #{tpu_custom_call.1} parent=1 // pred_check_branch
      %24 = sbr.rel (0) target = $region13
    $region12: #{tpu_custom_call.1} parent=1 // pred_region
      _
    $region13: #{tpu_custom_call.1} parent=1 // pred_fallthru
      _
    // Predicated region
    $region14: #{tpu_custom_call.1} parent=1 // pred_check
      _
    $region15: #{tpu_custom_call.1} parent=1 // pred_check_branch
      %26 = sbr.rel (0) target = $region17
    $region16: #{tpu_custom_call.1} parent=1 // pred_region
      %27 = dma.done [#allocation3], 384
    $region17: #{tpu_custom_call.1} parent=1 // pred_fallthru
      _
    %v28 = vld [vmem:[#allocation2] sm:$0xff]
    %v29 = vld [vmem:[#allocation2 + $0x8] sm:$0xff]
    %v30 = vld [vmem:[#allocation2 + $0x10] sm:$0xff]
    %vm31 = vcmp.ne.f32.partialorder %v28, %v28
    %vm32 = vcmp.ne.f32.partialorder %v29, %v29
    %vm33 = vcmp.ne.f32.partialorder %v30, %v30
    %v34 = vsel %vm31, 1e+10, %v28
    %v35 = vsel %vm32, 1e+10, %v29
    %v36 = vsel %vm33, 1e+10, %v30
    %v37 = vlaneseq
    %v38 = vand.u32 %v37, 127
    %vm39 = vcmask 523264
    %v40 = vsel %vm39, %v34, inf
    %41 = vmin.xlane.f32.xlu0 %v40
    %v42 = vpop.xlane.xlu0 %41
    %v43 = vsel %vm39, %v35, inf
    %44 = vmin.xlane.f32.xlu0 %v43
    %v45 = vpop.xlane.xlu0 %44
    %v46 = vsel %vm39, %v36, inf
    %47 = vmin.xlane.f32.xlu0 %v46
    %v48 = vpop.xlane.xlu0 %47
    %vm49 = vcmp.eq.f32.partialorder %v34, %v42
    %vm50 = vcmp.eq.f32.partialorder %v35, %v45
    %vm51 = vcmp.eq.f32.partialorder %v36, %v48
    %v52 = vsel %vm49, %v38, 64
    %v53 = vsel %vm50, %v38, 64
    %v54 = vsel %vm51, %v38, 64
    %v55 = vsel %vm39, %v52, 2147483647
    %v56 = vand.u32 %v55, 65535
    %v57 = vshra.s32 %v55, 16
    %v58 = vcvt.s32.f32 %v56
    %v59 = vcvt.s32.f32 %v57
    %60 = vmin.xlane.f32.xlu0 %v59
    %v61 = vpop.xlane.xlu0 %60
    %vm62 = vcmp.eq.f32.partialorder %v59, %v61
    %v63 = vsel %vm62, %v58, inf
    %64 = vmin.xlane.f32.xlu0 %v63
    %v65 = vpop.xlane.xlu0 %64
    %v66 = vcvt.f32.s32 %v65
    %v67 = vcvt.f32.s32 %v61
    %v68 = vshll.u32 %v67, 16
    %v69 = vadd.s32 %v68, %v66
    %v70 = vsel %vm39, %v53, 2147483647
    %v71 = vand.u32 %v70, 65535
    %v72 = vshra.s32 %v70, 16
    %v73 = vcvt.s32.f32 %v71
    %v74 = vcvt.s32.f32 %v72
    %75 = vmin.xlane.f32.xlu0 %v74
    %v76 = vpop.xlane.xlu0 %75
    %vm77 = vcmp.eq.f32.partialorder %v74, %v76
    %v78 = vsel %vm77, %v73, inf
    %79 = vmin.xlane.f32.xlu0 %v78
    %v80 = vpop.xlane.xlu0 %79
    %v81 = vcvt.f32.s32 %v80
    %v82 = vcvt.f32.s32 %v76
    %v83 = vshll.u32 %v82, 16
    %v84 = vadd.s32 %v83, %v81
    %v85 = vsel %vm39, %v54, 2147483647
    %v86 = vand.u32 %v85, 65535
    %v87 = vshra.s32 %v85, 16
    %v88 = vcvt.s32.f32 %v86
    %v89 = vcvt.s32.f32 %v87
    %90 = vmin.xlane.f32.xlu0 %v89
    %v91 = vpop.xlane.xlu0 %90
    %vm92 = vcmp.eq.f32.partialorder %v89, %v91
    %v93 = vsel %vm92, %v88, inf
    %94 = vmin.xlane.f32.xlu0 %v93
    %v95 = vpop.xlane.xlu0 %94
    %v96 = vcvt.f32.s32 %v95
    %v97 = vcvt.f32.s32 %v91
    %v98 = vshll.u32 %v97, 16
    %v99 = vadd.s32 %v98, %v96
    %vm100 = vcmp.eq.s32.totalorder %v38, %v69
    %vm101 = vcmp.eq.s32.totalorder %v38, %v84
    %vm102 = vcmp.eq.s32.totalorder %v38, %v99
    %v103 = vsel %vm100, 1, 0
    %v104 = vsel %vm101, 1, 0
    %v105 = vsel %vm102, 1, 0
    %v106 = vcvt.s32.f32 %v103
    %v107 = vcvt.s32.f32 %v104
    %v108 = vcvt.s32.f32 %v105
    %v109 = vadd.f32 %v106, 0.0
    %v110 = vadd.f32 %v107, 0.0
    %v111 = vadd.f32 %v108, 0.0
    %v112 = vsel %vm100, inf, %v34
    %v113 = vsel %vm101, inf, %v35
    %v114 = vsel %vm102, inf, %v36
    %v115 = vsel %vm39, %v112, inf
    %116 = vmin.xlane.f32.xlu0 %v115
    %v117 = vpop.xlane.xlu0 %116
    %v118 = vsel %vm39, %v113, inf
    %119 = vmin.xlane.f32.xlu0 %v118
    %v120 = vpop.xlane.xlu0 %119
    %v121 = vsel %vm39, %v114, inf
    %122 = vmin.xlane.f32.xlu0 %v121
    %v123 = vpop.xlane.xlu0 %122
    %vm124 = vcmp.eq.f32.partialorder %v112, %v117
    %vm125 = vcmp.eq.f32.partialorder %v113, %v120
    %vm126 = vcmp.eq.f32.partialorder %v114, %v123
    %v127 = vsel %vm124, %v38, 64
    %v128 = vsel %vm125, %v38, 64
    %v129 = vsel %vm126, %v38, 64
    %v130 = vsel %vm39, %v127, 2147483647
    %v131 = vand.u32 %v130, 65535
    %v132 = vshra.s32 %v130, 16
    %v133 = vcvt.s32.f32 %v131
    %v134 = vcvt.s32.f32 %v132
    %135 = vmin.xlane.f32.xlu0 %v134
    %v136 = vpop.xlane.xlu0 %135
    %vm137 = vcmp.eq.f32.partialorder %v134, %v136
    %v138 = vsel %vm137, %v133, inf
    %139 = vmin.xlane.f32.xlu0 %v138
    %v140 = vpop.xlane.xlu0 %139
    %v141 = vcvt.f32.s32 %v140
    %v142 = vcvt.f32.s32 %v136
    %v143 = vshll.u32 %v142, 16
    %v144 = vadd.s32 %v143, %v141
    %v145 = vsel %vm39, %v128, 2147483647
    %v146 = vand.u32 %v145, 65535
    %v147 = vshra.s32 %v145, 16
    %v148 = vcvt.s32.f32 %v146
    %v149 = vcvt.s32.f32 %v147
    %150 = vmin.xlane.f32.xlu0 %v149
    %v151 = vpop.xlane.xlu0 %150
    %vm152 = vcmp.eq.f32.partialorder %v149, %v151
    %v153 = vsel %vm152, %v148, inf
    %154 = vmin.xlane.f32.xlu0 %v153
    %v155 = vpop.xlane.xlu0 %154
    %v156 = vcvt.f32.s32 %v155
    %v157 = vcvt.f32.s32 %v151
    %v158 = vshll.u32 %v157, 16
    %v159 = vadd.s32 %v158, %v156
    %v160 = vsel %vm39, %v129, 2147483647
    %v161 = vand.u32 %v160, 65535
    %v162 = vshra.s32 %v160, 16
    %v163 = vcvt.s32.f32 %v161
    %v164 = vcvt.s32.f32 %v162
    %165 = vmin.xlane.f32.xlu0 %v164
    %v166 = vpop.xlane.xlu0 %165
    %vm167 = vcmp.eq.f32.partialorder %v164, %v166
    %v168 = vsel %vm167, %v163, inf
    %169 = vmin.xlane.f32.xlu0 %v168
    %v170 = vpop.xlane.xlu0 %169
    %v171 = vcvt.f32.s32 %v170
    %v172 = vcvt.f32.s32 %v166
    %v173 = vshll.u32 %v172, 16
    %v174 = vadd.s32 %v173, %v171
    %vm175 = vcmp.eq.s32.totalorder %v38, %v144
    %vm176 = vcmp.eq.s32.totalorder %v38, %v159
    %vm177 = vcmp.eq.s32.totalorder %v38, %v174
    %v178 = vsel %vm175, 1, 0
    %v179 = vsel %vm176, 1, 0
    %v180 = vsel %vm177, 1, 0
    %v181 = vcvt.s32.f32 %v178
    %v182 = vcvt.s32.f32 %v179
    %v183 = vcvt.s32.f32 %v180
    %v184 = vadd.f32 %v109, %v181
    %v185 = vadd.f32 %v110, %v182
    %v186 = vadd.f32 %v111, %v183
    %v187 = vsel %vm175, inf, %v112
    %v188 = vsel %vm176, inf, %v113
    %v189 = vsel %vm177, inf, %v114
    %v190 = vsel %vm39, %v187, inf
    %191 = vmin.xlane.f32.xlu0 %v190
    %v192 = vpop.xlane.xlu0 %191
    %v193 = vsel %vm39, %v188, inf
    %194 = vmin.xlane.f32.xlu0 %v193
    %v195 = vpop.xlane.xlu0 %194
    %v196 = vsel %vm39, %v189, inf
    %197 = vmin.xlane.f32.xlu0 %v196
    %v198 = vpop.xlane.xlu0 %197
    %vm199 = vcmp.eq.f32.partialorder %v187, %v192
    %vm200 = vcmp.eq.f32.partialorder %v188, %v195
    %vm201 = vcmp.eq.f32.partialorder %v189, %v198
    %v202 = vsel %vm199, %v38, 64
    %v203 = vsel %vm200, %v38, 64
    %v204 = vsel %vm201, %v38, 64
    %v205 = vsel %vm39, %v202, 2147483647
    %v206 = vand.u32 %v205, 65535
    %v207 = vshra.s32 %v205, 16
    %v208 = vcvt.s32.f32 %v206
    %v209 = vcvt.s32.f32 %v207
    %210 = vmin.xlane.f32.xlu0 %v209
    %v211 = vpop.xlane.xlu0 %210
    %vm212 = vcmp.eq.f32.partialorder %v209, %v211
    %v213 = vsel %vm212, %v208, inf
    %214 = vmin.xlane.f32.xlu0 %v213
    %v215 = vpop.xlane.xlu0 %214
    %v216 = vcvt.f32.s32 %v215
    %v217 = vcvt.f32.s32 %v211
    %v218 = vshll.u32 %v217, 16
    %v219 = vadd.s32 %v218, %v216
    %v220 = vsel %vm39, %v203, 2147483647
    %v221 = vand.u32 %v220, 65535
    %v222 = vshra.s32 %v220, 16
    %v223 = vcvt.s32.f32 %v221
    %v224 = vcvt.s32.f32 %v222
    %225 = vmin.xlane.f32.xlu0 %v224
    %v226 = vpop.xlane.xlu0 %225
    %vm227 = vcmp.eq.f32.partialorder %v224, %v226
    %v228 = vsel %vm227, %v223, inf
    %229 = vmin.xlane.f32.xlu0 %v228
    %v230 = vpop.xlane.xlu0 %229
    %v231 = vcvt.f32.s32 %v230
    %v232 = vcvt.f32.s32 %v226
    %v233 = vshll.u32 %v232, 16
    %v234 = vadd.s32 %v233, %v231
    %v235 = vsel %vm39, %v204, 2147483647
    %v236 = vand.u32 %v235, 65535
    %v237 = vshra.s32 %v235, 16
    %v238 = vcvt.s32.f32 %v236
    %v239 = vcvt.s32.f32 %v237
    %240 = vmin.xlane.f32.xlu0 %v239
    %v241 = vpop.xlane.xlu0 %240
    %vm242 = vcmp.eq.f32.partialorder %v239, %v241
    %v243 = vsel %vm242, %v238, inf
    %244 = vmin.xlane.f32.xlu0 %v243
    %v245 = vpop.xlane.xlu0 %244
    %v246 = vcvt.f32.s32 %v245
    %v247 = vcvt.f32.s32 %v241
    %v248 = vshll.u32 %v247, 16
    %v249 = vadd.s32 %v248, %v246
    %vm250 = vcmp.eq.s32.totalorder %v38, %v219
    %vm251 = vcmp.eq.s32.totalorder %v38, %v234
    %vm252 = vcmp.eq.s32.totalorder %v38, %v249
    %v253 = vsel %vm250, 1, 0
    %v254 = vsel %vm251, 1, 0
    %v255 = vsel %vm252, 1, 0
    %v256 = vcvt.s32.f32 %v253
    %v257 = vcvt.s32.f32 %v254
    %v258 = vcvt.s32.f32 %v255
    %v259 = vadd.f32 %v184, %v256
    %v260 = vadd.f32 %v185, %v257
    %v261 = vadd.f32 %v186, %v258
    %v262 = vsel %vm250, inf, %v187
    %v263 = vsel %vm251, inf, %v188
    %v264 = vsel %vm252, inf, %v189
    %v265 = vsel %vm39, %v262, inf
    %266 = vmin.xlane.f32.xlu0 %v265
    %v267 = vpop.xlane.xlu0 %266
    %v268 = vsel %vm39, %v263, inf
    %269 = vmin.xlane.f32.xlu0 %v268
    %v270 = vpop.xlane.xlu0 %269
    %v271 = vsel %vm39, %v264, inf
    %272 = vmin.xlane.f32.xlu0 %v271
    %v273 = vpop.xlane.xlu0 %272
    %vm274 = vcmp.eq.f32.partialorder %v262, %v267
    %vm275 = vcmp.eq.f32.partialorder %v263, %v270
    %vm276 = vcmp.eq.f32.partialorder %v264, %v273
    %v277 = vsel %vm274, %v38, 64
    %v278 = vsel %vm275, %v38, 64
    %v279 = vsel %vm276, %v38, 64
    %v280 = vsel %vm39, %v277, 2147483647
    %v281 = vand.u32 %v280, 65535
    %v282 = vshra.s32 %v280, 16
    %v283 = vcvt.s32.f32 %v281
    %v284 = vcvt.s32.f32 %v282
    %285 = vmin.xlane.f32.xlu0 %v284
    %v286 = vpop.xlane.xlu0 %285
    %vm287 = vcmp.eq.f32.partialorder %v284, %v286
    %v288 = vsel %vm287, %v283, inf
    %289 = vmin.xlane.f32.xlu0 %v288
    %v290 = vpop.xlane.xlu0 %289
    %v291 = vcvt.f32.s32 %v290
    %v292 = vcvt.f32.s32 %v286
    %v293 = vshll.u32 %v292, 16
    %v294 = vadd.s32 %v293, %v291
    %v295 = vsel %vm39, %v278, 2147483647
    %v296 = vand.u32 %v295, 65535
    %v297 = vshra.s32 %v295, 16
    %v298 = vcvt.s32.f32 %v296
    %v299 = vcvt.s32.f32 %v297
    %300 = vmin.xlane.f32.xlu0 %v299
    %v301 = vpop.xlane.xlu0 %300
    %vm302 = vcmp.eq.f32.partialorder %v299, %v301
    %v303 = vsel %vm302, %v298, inf
    %304 = vmin.xlane.f32.xlu0 %v303
    %v305 = vpop.xlane.xlu0 %304
    %v306 = vcvt.f32.s32 %v305
    %v307 = vcvt.f32.s32 %v301
    %v308 = vshll.u32 %v307, 16
    %v309 = vadd.s32 %v308, %v306
    %v310 = vsel %vm39, %v279, 2147483647
    %v311 = vand.u32 %v310, 65535
    %v312 = vshra.s32 %v310, 16
    %v313 = vcvt.s32.f32 %v311
    %v314 = vcvt.s32.f32 %v312
    %315 = vmin.xlane.f32.xlu0 %v314
    %v316 = vpop.xlane.xlu0 %315
    %vm317 = vcmp.eq.f32.partialorder %v314, %v316
    %v318 = vsel %vm317, %v313, inf
    %319 = vmin.xlane.f32.xlu0 %v318
    %v320 = vpop.xlane.xlu0 %319
    %v321 = vcvt.f32.s32 %v320
    %v322 = vcvt.f32.s32 %v316
    %v323 = vshll.u32 %v322, 16
    %v324 = vadd.s32 %v323, %v321
    %vm325 = vcmp.eq.s32.totalorder %v38, %v294
    %vm326 = vcmp.eq.s32.totalorder %v38, %v309
    %vm327 = vcmp.eq.s32.totalorder %v38, %v324
    %v328 = vsel %vm325, 1, 0
    %v329 = vsel %vm326, 1, 0
    %v330 = vsel %vm327, 1, 0
    %v331 = vcvt.s32.f32 %v328
    %v332 = vcvt.s32.f32 %v329
    %v333 = vcvt.s32.f32 %v330
    %v334 = vadd.f32 %v259, %v331
    %v335 = vadd.f32 %v260, %v332
    %v336 = vadd.f32 %v261, %v333
    %v337 = vsel %vm325, inf, %v262
    %v338 = vsel %vm326, inf, %v263
    %v339 = vsel %vm327, inf, %v264
    %v340 = vsel %vm39, %v337, inf
    %341 = vmin.xlane.f32.xlu0 %v340
    %v342 = vpop.xlane.xlu0 %341
    %v343 = vsel %vm39, %v338, inf
    %344 = vmin.xlane.f32.xlu0 %v343
    %v345 = vpop.xlane.xlu0 %344
    %v346 = vsel %vm39, %v339, inf
    %347 = vmin.xlane.f32.xlu0 %v346
    %v348 = vpop.xlane.xlu0 %347
    %vm349 = vcmp.eq.f32.partialorder %v337, %v342
    %vm350 = vcmp.eq.f32.partialorder %v338, %v345
    %vm351 = vcmp.eq.f32.partialorder %v339, %v348
    %v352 = vsel %vm349, %v38, 64
    %v353 = vsel %vm350, %v38, 64
    %v354 = vsel %vm351, %v38, 64
    %v355 = vsel %vm39, %v352, 2147483647
    %v356 = vand.u32 %v355, 65535
    %v357 = vshra.s32 %v355, 16
    %v358 = vcvt.s32.f32 %v356
    %v359 = vcvt.s32.f32 %v357
    %360 = vmin.xlane.f32.xlu0 %v359
    %v361 = vpop.xlane.xlu0 %360
    %vm362 = vcmp.eq.f32.partialorder %v359, %v361
    %v363 = vsel %vm362, %v358, inf
    %364 = vmin.xlane.f32.xlu0 %v363
    %v365 = vpop.xlane.xlu0 %364
    %v366 = vcvt.f32.s32 %v365
    %v367 = vcvt.f32.s32 %v361
    %v368 = vshll.u32 %v367, 16
    %v369 = vadd.s32 %v368, %v366
    %v370 = vsel %vm39, %v353, 2147483647
    %v371 = vand.u32 %v370, 65535
    %v372 = vshra.s32 %v370, 16
    %v373 = vcvt.s32.f32 %v371
    %v374 = vcvt.s32.f32 %v372
    %375 = vmin.xlane.f32.xlu0 %v374
    %v376 = vpop.xlane.xlu0 %375
    %vm377 = vcmp.eq.f32.partialorder %v374, %v376
    %v378 = vsel %vm377, %v373, inf
    %379 = vmin.xlane.f32.xlu0 %v378
    %v380 = vpop.xlane.xlu0 %379
    %v381 = vcvt.f32.s32 %v380
    %v382 = vcvt.f32.s32 %v376
    %v383 = vshll.u32 %v382, 16
    %v384 = vadd.s32 %v383, %v381
    %v385 = vsel %vm39, %v354, 2147483647
    %v386 = vand.u32 %v385, 65535
    %v387 = vshra.s32 %v385, 16
    %v388 = vcvt.s32.f32 %v386
    %v389 = vcvt.s32.f32 %v387
    %390 = vmin.xlane.f32.xlu0 %v389
    %v391 = vpop.xlane.xlu0 %390
    %vm392 = vcmp.eq.f32.partialorder %v389, %v391
    %v393 = vsel %vm392, %v388, inf
    %394 = vmin.xlane.f32.xlu0 %v393
    %v395 = vpop.xlane.xlu0 %394
    %v396 = vcvt.f32.s32 %v395
    %v397 = vcvt.f32.s32 %v391
    %v398 = vshll.u32 %v397, 16
    %v399 = vadd.s32 %v398, %v396
    %vm400 = vcmp.eq.s32.totalorder %v38, %v369
    %vm401 = vcmp.eq.s32.totalorder %v38, %v384
    %vm402 = vcmp.eq.s32.totalorder %v38, %v399
    %v403 = vsel %vm400, 1, 0
    %v404 = vsel %vm401, 1, 0
    %v405 = vsel %vm402, 1, 0
    %v406 = vcvt.s32.f32 %v403
    %v407 = vcvt.s32.f32 %v404
    %v408 = vcvt.s32.f32 %v405
    %v409 = vadd.f32 %v334, %v406
    %v410 = vadd.f32 %v335, %v407
    %v411 = vadd.f32 %v336, %v408
    %v412 = vld [vmem:[%s1] sm:$0x1]
    %v414 = vlaneseq
    %v415 = vshrl.u32 %v414, 7
    %v416 = vsub.s32 0, %v415
    %v417 = vrot.slane %v412, %v416
    %v419 = vmul.f32 %v409, %v417
    %v420 = vmul.f32 %v410, %v417
    %v421 = vmul.f32 %v411, %v417
    %v422 = vsel %vm39, %v419, 0.0
    %423 = vadd.xlane.f32.xlu0 %v422
    %v424 = vpop.xlane.xlu0 %423
    %v425 = vsel %vm39, %v420, 0.0
    %426 = vadd.xlane.f32.xlu0 %v425
    %v427 = vpop.xlane.xlu0 %426
    %v428 = vsel %vm39, %v421, 0.0
    %429 = vadd.xlane.f32.xlu0 %v428
    %v430 = vpop.xlane.xlu0 %429
    %v431 = vld [vmem:[%s2] sm:$0x1]
    %v433 = vlaneseq
    %v434 = vshrl.u32 %v433, 7
    %v435 = vsub.s32 0, %v434
    %v436 = vrot.slane %v431, %v435
    %v438 = vmul.f32 %v409, %v436
    %v439 = vmul.f32 %v410, %v436
    %v440 = vmul.f32 %v411, %v436
    %v441 = vsel %vm39, %v438, 0.0
    %442 = vadd.xlane.f32.xlu0 %v441
    %v443 = vpop.xlane.xlu0 %442
    %v444 = vsel %vm39, %v439, 0.0
    %445 = vadd.xlane.f32.xlu0 %v444
    %v446 = vpop.xlane.xlu0 %445
    %v447 = vsel %vm39, %v440, 0.0
    %448 = vadd.xlane.f32.xlu0 %v447
    %v449 = vpop.xlane.xlu0 %448
    %vm450 = vcmp.eq.f32.partialorder %v443, 0.0
    %vm451 = vcmp.eq.f32.partialorder %v446, 0.0
    %vm452 = vcmp.eq.f32.partialorder %v449, 0.0
    %v453 = vsel %vm450, 1.0, %v443
    %v454 = vsel %vm451, 1.0, %v446
    %v455 = vsel %vm452, 1.0, %v449
    %v456 = vrcp.pop %v453
    %v457 = vmul.f32 %v424, %v456
    %v458 = vrcp.pop %v454
    %v459 = vmul.f32 %v427, %v458
    %v460 = vrcp.pop %v455
    %v461 = vmul.f32 %v430, %v460
    %vm462 = vcmask 7168
    %463 = vst.msk [vmem:[%s3] sm:$0xff] %vm462, %v457
    %464 = vst.msk [vmem:[%s3 + $0x8] sm:$0xff] %vm462, %v459
    %465 = vst.msk [vmem:[%s3 + $0x10] sm:$0xff] %vm462, %v461
    // Predicated region
    $region18: #{tpu_custom_call.1} parent=1 // pred_check
      _
    $region19: #{tpu_custom_call.1} parent=1 // pred_check_branch
      %467 = sbr.rel (0) target = $region21
    $region20: #{tpu_custom_call.1} parent=1 // pred_region
      _
    $region21: #{tpu_custom_call.1} parent=1 // pred_fallthru
      _
    // Predicated region
    $region22: #{tpu_custom_call.1} parent=1 // pred_check
      _
    $region23: #{tpu_custom_call.1} parent=1 // pred_check_branch
      %469 = sbr.rel (0) target = $region25
    $region24: #{tpu_custom_call.1} parent=1 // pred_region
      _
    $region25: #{tpu_custom_call.1} parent=1 // pred_fallthru
      _
    %470 = vsyncpa [#allocation3], 1

</llo_original>
